<compile_context>
chip_gen: v6e
topology: v6e:2x2x1
jax: 0.10.0
libtpu: 0.0.40
codegen_flags: <defaults>
</compile_context>

<pallas_src>
import functools

import jax
import jax.numpy as jnp
from jax.experimental import pallas as pl
from jax.experimental.pallas import tpu as pltpu


# --------------------------------------------------------------------------- #
# Pallas kernel
# --------------------------------------------------------------------------- #
def _semantic_encoder_kernel(ed_ref, rot_ref, o_ref, *, L, H):
    """Rotate every metapath step (interleaved complex) and mean over steps.

    ed_ref : (tE, L*H) f32/bf16  edge data, steps concatenated along lanes
    rot_ref: (3,  L*H) f32       rows = [A, Bneg, Bpos], 1/L mean folded in
    o_ref  : (tE, H)   f32       mean over the L rotated steps (interleaved)
    """
    LH = L * H
    if H % 128 == 0:
        # Per-step chunk loop: vreg-aligned lane slices, low live-vreg pressure.
        acc = jnp.zeros(o_ref.shape, jnp.float32)
        for i in range(L):
            lo, hi = i * H, (i + 1) * H
            chunk = ed_ref[:, lo:hi].astype(jnp.float32)        # (tE, H)
            a = rot_ref[0:1, lo:hi]                             # (1, H) [c, c]/L
            bneg = rot_ref[1:2, lo:hi]                          # (1, H) [-d, 0]/L
            bpos = rot_ref[2:3, lo:hi]                          # (1, H) [0,  d]/L
            left = pltpu.roll(chunk, H - 1, 1)                  # lane j <- chunk[j+1]
            right = pltpu.roll(chunk, 1, 1)                     # lane j <- chunk[j-1]
            acc = acc + chunk * a + left * bneg + right * bpos
        o_ref[...] = acc.astype(o_ref.dtype)
    else:
        # Full-row form (lane-dense when L*H is a multiple of 128, e.g. 128/256).
        ed = ed_ref[...].astype(jnp.float32)                    # (tE, LH)
        a = rot_ref[0:1, :]
        bneg = rot_ref[1:2, :]
        bpos = rot_ref[2:3, :]
        left = pltpu.roll(ed, LH - 1, 1)                        # XLU rotate
        right = pltpu.roll(ed, 1, 1)                            # XLU rotate
        rotated = ed * a + left * bneg + right * bpos           # pure VPU
        acc = rotated[:, 0:H]
        for i in range(1, L):
            acc = acc + rotated[:, i * H:(i + 1) * H]
        o_ref[...] = acc.astype(o_ref.dtype)


# --------------------------------------------------------------------------- #
# Device-aware sizing
# --------------------------------------------------------------------------- #
def _device_vmem_bytes():
    """Physical VMEM capacity (128 MiB on v5e/v6e, 64 MiB on v7x)."""
    try:
        info = pltpu.get_tpu_info()
        cap = getattr(info, "vmem_capacity_bytes", None)
        if cap:
            return int(cap)
    except Exception:
        pass
    return 64 * 1024 * 1024  # conservative fallback (v7x-sized)


def _scoped_vmem_limit():
    """Scoped VMEM limit: ~64 MiB on v5e/v6e, ~48 MiB on v7x."""
    cap = _device_vmem_bytes()
    limit = min(cap - (16 << 20), 64 << 20)
    return max(limit, 16 << 20)


def _choose_tile_e(E, L, H, in_itemsize, vmem_limit_bytes):
    """Edge-axis tile: as large as VMEM allows, but with enough balanced grid
    steps on large E for v7x's two TensorCores."""
    LH = L * H
    sub = 16 if in_itemsize == 2 else 8          # sublane packing multiple
    if E * LH * in_itemsize <= (4 << 20):        # whole edata is one small slab
        return E
    bytes_per_row = 2 * LH * in_itemsize + 2 * H * 4   # dbl-buffered in + out
    budget = int(vmem_limit_bytes * 0.7)
    t_mem = max(sub, budget // max(bytes_per_row, 1))
    t_balance = -(-E // 8)                       # >= ~8 grid steps on large E
    t = max(sub, min(t_mem, t_balance))
    t = (t // sub) * sub
    return min(t, E)


# --------------------------------------------------------------------------- #
# pallas_call wrapper
# --------------------------------------------------------------------------- #
def _run_kernel(ed_flat, rot, L, H, tile_e=None):
    E = ed_flat.shape[0]
    LH = L * H
    in_itemsize = jnp.dtype(ed_flat.dtype).itemsize
    vmem_limit = _scoped_vmem_limit()

    if tile_e is None:
        tE = _choose_tile_e(E, L, H, in_itemsize, vmem_limit)
    else:
        tE = min(int(tile_e), E)
        if tE != E:
            tE = max(8, (tE // 8) * 8)           # keep (8,·)-divisible blocks
    grid = (pl.cdiv(E, tE),)

    kernel = functools.partial(_semantic_encoder_kernel, L=L, H=H)
    flops = 8 * E * L * H                         # rotation + step summation
    bytes_accessed = (E * LH * in_itemsize        # edata read
                      + E * H * 4                 # output write
                      + 3 * LH * 4 * grid[0])     # resident rot table per step

    return pl.pallas_call(
        kernel,
        out_shape=jax.ShapeDtypeStruct((E, H), jnp.float32),
        grid_spec=pltpu.PrefetchScalarGridSpec(
            num_scalar_prefetch=0,
            grid=grid,
            in_specs=[
                pl.BlockSpec((tE, LH), lambda i: (i, 0)),   # contiguous edge tile
                pl.BlockSpec((3, LH), lambda i: (0, 0)),    # rot table, resident
            ],
            out_specs=pl.BlockSpec((tE, H), lambda i: (i, 0)),
        ),
        compiler_params=pltpu.CompilerParams(
            dimension_semantics=("parallel",),
            vmem_limit_bytes=int(vmem_limit),
        ),
        cost_estimate=pl.CostEstimate(
            flops=int(flops),
            transcendentals=0,
            bytes_accessed=int(bytes_accessed),
        ),
    )(ed_flat, rot)


# --------------------------------------------------------------------------- #
# Glue: rotation-table construction (tiny, static backward scan over L steps)
# --------------------------------------------------------------------------- #
def _final_r_vec(r_vec, etypes, L, Hc):
    """Returns (c, d): real/imag of final_r_vec, shape (L, Hc) each."""
    # F.normalize(r_vec, p=2, dim=2) with eps=1e-12 (normalize each complex pair)
    norm = jnp.sqrt(jnp.sum(r_vec * r_vec, axis=2, keepdims=True))
    rv = r_vec / jnp.maximum(norm, 1e-12)                  # (R, Hc, 2)
    rv2 = jnp.stack([rv, rv], axis=1)                      # (R, 2, Hc, 2)
    rv2 = rv2.at[:, 1, :, 1].multiply(-1.0)                # conjugate rows
    rv2 = rv2.reshape(r_vec.shape[0] * 2, Hc, 2)           # (2R, Hc, 2)

    fr_re = [None] * L
    fr_im = [None] * L
    fr_re[L - 1] = jnp.ones((Hc,), jnp.float32)
    fr_im[L - 1] = jnp.zeros((Hc,), jnp.float32)
    for i in range(L - 2, -1, -1):
        pr, pi = fr_re[i + 1], fr_im[i + 1]
        if etypes[i] is not None:
            rre = rv2[etypes[i], :, 0]
            rim = rv2[etypes[i], :, 1]
            fr_re[i] = pr * rre - pi * rim
            fr_im[i] = pr * rim + pi * rre
        else:
            fr_re[i] = pr
            fr_im[i] = pi
    return jnp.stack(fr_re, axis=0), jnp.stack(fr_im, axis=0)   # (L, Hc) each


def _build_rot_tables(r_vec, etypes, L, H):
    """Builds the (3, L*H) interleaved tables [A, Bneg, Bpos] with 1/L folded in."""
    Hc = H // 2
    c, d = _final_r_vec(r_vec, etypes, L, Hc)              # (L, Hc)
    inv_l = jnp.float32(1.0 / L)
    zeros = jnp.zeros_like(d)
    a = jnp.stack([c, c], axis=-1).reshape(L, H) * inv_l          # [c, c, ...]
    bneg = jnp.stack([-d, zeros], axis=-1).reshape(L, H) * inv_l  # [-d, 0, ...]
    bpos = jnp.stack([zeros, d], axis=-1).reshape(L, H) * inv_l   # [0, d, ...]
    return jnp.stack([a, bneg, bpos], axis=0).reshape(3, L * H).astype(jnp.float32)


def semantic_encoder_forward(edata, r_vec, etypes, hidden_size,
                             storage_dtype=None, tile_e=None):
    """Forward pass. `storage_dtype=jnp.bfloat16` halves HBM read traffic
    (compute stays f32); default keeps the module's f32 numerics exactly."""
    E, L, H = edata.shape
    assert H == hidden_size and H % 2 == 0
    rot = _build_rot_tables(r_vec, etypes, L, H)           # (3, L*H), tiny
    ed = edata if storage_dtype is None else edata.astype(storage_dtype)
    ed_flat = ed.reshape(E, L * H)                         # free bitcast (no HBM pass)
    return _run_kernel(ed_flat, rot, L, H, tile_e=tile_e)  # (E, H) f32


# Pure-JAX reference mirroring the PyTorch forward literally (for verification).
def semantic_encoder_reference(edata, r_vec, etypes, hidden_size):
    E, L, H = edata.shape
    Hc = H // 2
    c, d = _final_r_vec(r_vec, etypes, L, Hc)
    ed = edata.reshape(E, L, Hc, 2)
    er, ei = ed[..., 0], ed[..., 1]
    new_re, new_im = er, ei
    for i in range(L - 1):
        t1 = er[:, i] * c[i] - ei[:, i] * d[i]
        t2 = er[:, i] * d[i] + ei[:, i] * c[i]
        new_re = new_re.at[:, i].set(t1)
        new_im = new_im.at[:, i].set(t2)
    out = jnp.stack([new_re, new_im], axis=-1).reshape(E, L, H)
    return jnp.mean(out, axis=1)


if __name__ == "__main__":
    key = jax.random.PRNGKey(0)
    k1, k2, k3, k4, k5, k6 = jax.random.split(key, 6)

    # ---- test 1: tiny shapes, single block, full-row (H < 128) path -------- #
    E, L, hidden_size, num_rel = 8, 4, 32, 3
    etypes = [0, None, 5]      # indices into the (2*num_rel)-row expanded table
    edata = jax.random.normal(k1, (E, L, hidden_size), dtype=jnp.float32)
    r_vec = jax.random.normal(k2, (num_rel, hidden_size // 2, 2), dtype=jnp.float32)

    fwd = jax.jit(functools.partial(semantic_encoder_forward,
                                    etypes=etypes, hidden_size=hidden_size))
    out = jax.block_until_ready(fwd(edata, r_vec))
    ref = semantic_encoder_reference(edata, r_vec, etypes, hidden_size)
    assert out.shape == (E, hidden_size)
    assert jnp.allclose(out, ref, atol=1e-5, rtol=1e-5), "mismatch vs reference (test 1)"

    # ---- test 2: multi-step parallel grid + uneven tail (forced tiling) ---- #
    E2, L2, hidden2, num_rel2 = 300, 4, 64, 3
    etypes2 = [1, None, 4]
    edata2 = jax.random.normal(k3, (E2, L2, hidden2), dtype=jnp.float32)
    r_vec2 = jax.random.normal(k4, (num_rel2, hidden2 // 2, 2), dtype=jnp.float32)

    fwd2 = jax.jit(functools.partial(semantic_encoder_forward,
                                     etypes=etypes2, hidden_size=hidden2,
                                     tile_e=128))
    out2 = jax.block_until_ready(fwd2(edata2, r_vec2))
    ref2 = semantic_encoder_reference(edata2, r_vec2, etypes2, hidden2)
    assert out2.shape == (E2, hidden2)
    assert jnp.allclose(out2, ref2, atol=1e-5, rtol=1e-5), "mismatch vs reference (test 2)"

    # ---- test 3: H = 128 -> lane-aligned per-step chunk path --------------- #
    E3, L3, hidden3, num_rel3 = 64, 3, 128, 3
    etypes3 = [2, None]
    edata3 = jax.random.normal(k5, (E3, L3, hidden3), dtype=jnp.float32)
    r_vec3 = jax.random.normal(k6, (num_rel3, hidden3 // 2, 2), dtype=jnp.float32)

    fwd3 = jax.jit(functools.partial(semantic_encoder_forward,
                                     etypes=etypes3, hidden_size=hidden3))
    out3 = jax.block_until_ready(fwd3(edata3, r_vec3))
    ref3 = semantic_encoder_reference(edata3, r_vec3, etypes3, hidden3)
    assert out3.shape == (E3, hidden3)
    assert jnp.allclose(out3, ref3, atol=1e-5, rtol=1e-5), "mismatch vs reference (test 3)"

    # ---- test 4: bf16 storage / f32 compute (half HBM read traffic) -------- #
    fwd4 = jax.jit(functools.partial(semantic_encoder_forward,
                                     etypes=etypes2, hidden_size=hidden2,
                                     storage_dtype=jnp.bfloat16))
    out4 = jax.block_until_ready(fwd4(edata2, r_vec2))
    assert out4.shape == (E2, hidden2)
    assert jnp.allclose(out4, ref2, atol=5e-2, rtol=5e-2), "mismatch vs reference (test 4, bf16)"

    print("KERNEL_OK")
</pallas_src>

<mosaic_0001>
module attributes {stable_mosaic.version = 11 : i64} {
  func.func @_semantic_encoder_kernel(%arg0: i32, %arg1: memref<8x128xf32, #tpu.memory_space<vmem>>, %arg2: memref<3x128xf32, #tpu.memory_space<vmem>>, %arg3: memref<8x32xf32, #tpu.memory_space<vmem>>) attributes {dimension_semantics = [#tpu.dimension_semantics<parallel>], iteration_bounds = array<i64: 1>, scalar_prefetch = 0 : i64, scratch_operands = 0 : i64, tpu.core_type = #tpu.core_type<tc>, window_params = [{transform_indices = @transform_0, window_bounds = array<i64: 8, 128>}, {pipeline_mode = #tpu.pipeline_mode<synchronous>, transform_indices = @transform_1, window_bounds = array<i64: 3, 128>}, {transform_indices = @transform_2, window_bounds = array<i64: 8, 32>}]} {
    %c0 = arith.constant 0 : index
    %c0_0 = arith.constant 0 : index
    %0 = vector.load %arg1[%c0, %c0_0] : memref<8x128xf32, #tpu.memory_space<vmem>>, vector<8x128xf32>
    %c0_1 = arith.constant 0 : index
    %c0_2 = arith.constant 0 : index
    %1 = vector.load %arg2[%c0_1, %c0_2] : memref<3x128xf32, #tpu.memory_space<vmem>>, vector<1x128xf32>
    %c1 = arith.constant 1 : index
    %c0_3 = arith.constant 0 : index
    %2 = vector.load %arg2[%c1, %c0_3] : memref<3x128xf32, #tpu.memory_space<vmem>>, vector<1x128xf32>
    %c2 = arith.constant 2 : index
    %c0_4 = arith.constant 0 : index
    %3 = vector.load %arg2[%c2, %c0_4] : memref<3x128xf32, #tpu.memory_space<vmem>>, vector<1x128xf32>
    %c127_i32 = arith.constant 127 : i32
    %4 = tpu.dynamic_rotate %0 by %c127_i32 dim 1 : vector<8x128xf32>, i32 -> vector<8x128xf32>
    %c1_i32 = arith.constant 1 : i32
    %5 = tpu.dynamic_rotate %0 by %c1_i32 dim 1 : vector<8x128xf32>, i32 -> vector<8x128xf32>
    %6 = vector.broadcast %1 : vector<1x128xf32> to vector<8x128xf32>
    %7 = arith.mulf %0, %6 : vector<8x128xf32>
    %8 = vector.broadcast %2 : vector<1x128xf32> to vector<8x128xf32>
    %9 = arith.mulf %4, %8 : vector<8x128xf32>
    %10 = arith.addf %7, %9 : vector<8x128xf32>
    %11 = vector.broadcast %3 : vector<1x128xf32> to vector<8x128xf32>
    %12 = arith.mulf %5, %11 : vector<8x128xf32>
    %13 = arith.addf %10, %12 : vector<8x128xf32>
    %14 = vector.extract_strided_slice %13 {offsets = [0, 0], sizes = [8, 32], strides = [1, 1]} : vector<8x128xf32> to vector<8x32xf32>
    %15 = vector.extract_strided_slice %13 {offsets = [0, 32], sizes = [8, 32], strides = [1, 1]} : vector<8x128xf32> to vector<8x32xf32>
    %16 = arith.addf %14, %15 : vector<8x32xf32>
    %17 = vector.extract_strided_slice %13 {offsets = [0, 64], sizes = [8, 32], strides = [1, 1]} : vector<8x128xf32> to vector<8x32xf32>
    %18 = arith.addf %16, %17 : vector<8x32xf32>
    %19 = vector.extract_strided_slice %13 {offsets = [0, 96], sizes = [8, 32], strides = [1, 1]} : vector<8x128xf32> to vector<8x32xf32>
    %20 = arith.addf %18, %19 : vector<8x32xf32>
    %c0_5 = arith.constant 0 : index
    %c0_6 = arith.constant 0 : index
    %21 = vector.load %arg3[%c0_5, %c0_6] : memref<8x32xf32, #tpu.memory_space<vmem>>, vector<8x32xf32>
    tpu.vector_store %arg3[%c0_5, %c0_6], %20 {strides = array<i32>} : memref<8x32xf32, #tpu.memory_space<vmem>>, vector<8x32xf32>,
    return
  }
  func.func @transform_0(%arg0: i32) -> (i32, i32) {
    %c0_i32 = arith.constant 0 : i32
    %c0_i32_0 = arith.constant 0 : i32
    return %arg0, %c0_i32 : i32, i32
  }
  func.func @transform_1(%arg0: i32) -> (i32, i32) {
    %c0_i32 = arith.constant 0 : i32
    %c0_i32_0 = arith.constant 0 : i32
    %c0_i32_1 = arith.constant 0 : i32
    return %c0_i32, %c0_i32_0 : i32, i32
  }
  func.func @transform_2(%arg0: i32) -> (i32, i32) {
    %c0_i32 = arith.constant 0 : i32
    %c0_i32_0 = arith.constant 0 : i32
    return %arg0, %c0_i32 : i32, i32
  }
}

</mosaic_0001>

<llo_original>
// kernel: semantic_encoder_forward.1
$region0: #{semantic_encoder_forward.1}
  #allocation0 [shape = 'u32[]', space=smem, size = 0x4, offset = 0x4, fixed_abs, tag = 'smem constant byte address 0x4 - core index']
  #allocation1 [shape = 'u32[144,128]{1,0:T(1,128)}', space=vmem, size = 0x12000, scoped, tag = 'internal scratch']
  %s0 = inlined_call_operand.vmem [shape: f32[8,128], index: 0, kind: input, shape index: {}]
  %s1 = inlined_call_operand.vmem [shape: f32[3,128], index: 1, kind: input, shape index: {}]
  %s2 = inlined_call_operand.hbm [shape: f32[8,32], index: 2, kind: output, shape index: {}]
  %s3 = sld [smem:[#allocation0]]
  $region18: #{semantic_encoder_forward.1} parent=0
    _
  %s5 = ssub.s32 1, %s3
  %s6 = scalar_select 0, %s5, %s3
  $region1: #{semantic_encoder_forward.1} parent=0
    #allocation2 [shape = 'u8[4096]{0}', space=vmem, size = 0x1000, scoped, tag = 'output window, operand 0, single buffered']
    #allocation3 [shape = 's32[1]{0}', space=sflag, size = 0x4, scoped, tag = 'scoped memory for semantic_encoder_forward.1']
    %7 = vsyncpa [#allocation3], 0
    // Predicated region
    $region2: #{semantic_encoder_forward.1} parent=1 // pred_check
      _
    $region3: #{semantic_encoder_forward.1} parent=1 // pred_check_branch
      %9 = sbr.rel (0) target = $region5
    $region4: #{semantic_encoder_forward.1} parent=1 // pred_region
      _
    $region5: #{semantic_encoder_forward.1} parent=1 // pred_fallthru
      _
    // Predicated region
    $region6: #{semantic_encoder_forward.1} parent=1 // pred_check
      _
    $region7: #{semantic_encoder_forward.1} parent=1 // pred_check_branch
      %11 = sbr.rel (0) target = $region9
    $region8: #{semantic_encoder_forward.1} parent=1 // pred_region
      _
    $region9: #{semantic_encoder_forward.1} parent=1 // pred_fallthru
      _
    %v12 = vld [vmem:[%s0] sm:$0xff]
    %v13 = vld [vmem:[%s1] sm:$0x1]
    %v14 = vld [vmem:[%s1 + $0x1] sm:$0x1]
    %v15 = vld [vmem:[%s1 + $0x2] sm:$0x1]
    %16 = vrot.lane.b32.xlu0 %v12, 127
    %v17 = vpop.permute.xlu0 %16
    %18 = vrot.lane.b32.xlu0 %v12, 1
    %v19 = vpop.permute.xlu0 %18
    %v20 = vlaneseq
    %v21 = vshrl.u32 %v20, 7
    %v22 = vsub.s32 0, %v21
    %v23 = vrot.slane %v13, %v22
    %v24 = vmul.f32 %v12, %v23
    %v25 = vlaneseq
    %v26 = vshrl.u32 %v25, 7
    %v27 = vsub.s32 0, %v26
    %v28 = vrot.slane %v14, %v27
    %v29 = vmul.f32 %v17, %v28
    %v30 = vadd.f32 %v24, %v29
    %v31 = vlaneseq
    %v32 = vshrl.u32 %v31, 7
    %v33 = vsub.s32 0, %v32
    %v34 = vrot.slane %v15, %v33
    %v35 = vmul.f32 %v19, %v34
    %v36 = vadd.f32 %v30, %v35
    %38 = vrot.lane.b32.xlu0 %v36, 96
    %v39 = vpop.permute.xlu0 %38
    %v41 = vadd.f32 %v36, %v39
    %42 = vrot.lane.b32.xlu0 %v36, 64
    %v43 = vpop.permute.xlu0 %42
    %v45 = vadd.f32 %v41, %v43
    %46 = vrot.lane.b32.xlu0 %v36, 32
    %v47 = vpop.permute.xlu0 %46
    %v49 = vadd.f32 %v45, %v47
    %vm50 = vcmask 261120
    %51 = vst.msk [vmem:[#allocation2] sm:$0xff] %vm50, %v49
    // Predicated region
    $region10: #{semantic_encoder_forward.1} parent=1 // pred_check
      _
    $region11: #{semantic_encoder_forward.1} parent=1 // pred_check_branch
      %53 = sbr.rel (0) target = $region13
    $region12: #{semantic_encoder_forward.1} parent=1 // pred_region
      %s55 = ssub.s32 128, 128
      %56 = vsyncadd [#allocation3], %s55
      %s58 = sshll.u32 [#allocation2], 4
      %s59 = int_to_ptr.vmem [resolvable:$true] %s58
      %61 = dma.vmem_to_hbm [thread:$0]  %s59, 128, %s2, [#allocation3]
    $region13: #{semantic_encoder_forward.1} parent=1 // pred_fallthru
      _
    // Predicated region
    $region14: #{semantic_encoder_forward.1} parent=1 // pred_check
      _
    $region15: #{semantic_encoder_forward.1} parent=1 // pred_check_branch
      %63 = sbr.rel (0) target = $region17
    $region16: #{semantic_encoder_forward.1} parent=1 // pred_region
      %64 = dma.done [#allocation3], 128
    $region17: #{semantic_encoder_forward.1} parent=1 // pred_fallthru
      _
    %65 = vsyncpa [#allocation3], 1

</llo_original>
